<compile_context>
chip_gen: v7x
topology: tpu7x:2x2x1
jax: 0.10.0
libtpu: 0.0.40
codegen_flags: <defaults>
</compile_context>

<pallas_src>
import math

import jax
import jax.numpy as jnp
from jax import lax
from jax.experimental import pallas as pl
from jax.experimental.pallas import tpu as pltpu


def _round_up(x: int, n: int) -> int:
    return ((x + n - 1) // n) * n


def _pick_tile(total: int, preferred: int, align: int):
    """Largest multiple of `align`, <= preferred, dividing round_up(total, align)."""
    padded = _round_up(max(total, 1), align)
    t = max(align, min((preferred // align) * align, padded))
    while padded % t != 0:
        t -= align
    return t, padded


def _make_arcmargin_kernel(s: float, m: float, easy_margin: bool, tile_c: int):
    cos_m = math.cos(m)
    sin_m = math.sin(m)
    th = math.cos(math.pi - m)
    mm = math.sin(math.pi - m) * m
    inv_s = 1.0 / s

    def kernel(x_ref, w_ref, inv_xn_s_ref, inv_wn_ref, labels_ref, out_ref):
        ci = pl.program_id(0)  # class-tile (outer) index

        # (TB, D) bf16  x  (TC, D) bf16, contracting on D (NT form, no transpose
        # materialized anywhere), f32 accumulation on the MXU.
        dot = lax.dot_general(
            x_ref[...], w_ref[...],
            dimension_numbers=(((1,), (1,)), ((), ())),
            preferred_element_type=jnp.float32)                   # (TB, TC)

        # Normalization AND the ArcFace scale folded into cheap post-matmul
        # scales: scaled == s * cosine.
        scaled = dot * inv_xn_s_ref[...] * inv_wn_ref[...]         # (TB, TC)

        # Per-row target cosine: the expensive margin math only touches the one
        # target logit per row, so compute it on a (TB, 1) vector.
        tb, tc = scaled.shape
        class_ids = lax.broadcasted_iota(jnp.int32, (tb, tc), 1) + ci * tile_c
        is_target = class_ids == labels_ref[...]                   # (TB, TC)
        target_cos = inv_s * jnp.sum(jnp.where(is_target, scaled, 0.0),
                                     axis=-1, keepdims=True)       # (TB, 1)

        sine = jnp.sqrt(jnp.maximum(1.0 - target_cos * target_cos, 0.0))
        phi = target_cos * cos_m - sine * sin_m
        if easy_margin:
            phi = jnp.where(target_cos > 0.0, phi, target_cos)
        else:
            phi = jnp.where(target_cos > th, phi, target_cos - mm)

        # Rows whose target class is not in this tile have is_target all-False,
        # so the (irrelevant) phi value is never selected.
        out_ref[...] = jnp.where(is_target, phi * s, scaled).astype(out_ref.dtype)

    return kernel


def arc_margin_product(x, weight, labels, *, s=30.0, m=0.5, easy_margin=False,
                       block_b=256, block_c=None):
    """ArcFace logits.

    x: (B, in_features), weight: (out_features, in_features), labels: (B,).
    Returns (B, out_features) float32. The matmul runs in bf16 with f32
    accumulation; store `weight` as bf16 to avoid the per-call cast.
    """
    B, D = x.shape
    C, D2 = weight.shape
    assert D == D2, "feature dims must match"
    eps = 1e-12  # F.normalize default eps
    s = float(s)

    # ---- generation-aware sizing -------------------------------------------
    try:
        vmem_cap = int(pltpu.get_tpu_info().vmem_capacity_bytes)
        vmem_known = True
    except Exception:  # conservative fallback, no single-buffer tricks
        vmem_cap = 64 << 20
        vmem_known = False
    vmem_budget = max(32 << 20, min((vmem_cap * 3) // 4, 100 << 20))

    if block_c is None:
        block_c = 4096 if vmem_budget >= (80 << 20) else 2048

    TB, Bp = _pick_tile(B, block_b, 16)    # bf16 sublane packing -> mult of 16
    TC, Cp = _pick_tile(C, block_c, 128)   # lane-dense output tiles

    # Weight tile is single-buffered only on low-VMEM (v7x) parts: its block
    # index changes once per class tile, so the second buffer is mostly waste.
    single_buf_w = vmem_known and vmem_cap < (96 << 20)

    def _est(tb, tc):
        wbuf = 1 if single_buf_w else 2
        return (2 * tb * D * 2          # x tile (bf16, double-buffered)
                + wbuf * tc * D * 2     # weight tile (bf16)
                + 2 * tb * tc * 4       # output tile (f32, double-buffered)
                + 4 * (4 * tb + 2 * tc))

    while _est(TB, TC) > (vmem_budget * 6) // 10 and TC > 128:
        TC, Cp = _pick_tile(C, TC // 2, 128)
    while _est(TB, TC) > (vmem_budget * 6) // 10 and TB > 16:
        TB, Bp = _pick_tile(B, TB // 2, 16)

    n_c = Cp // TC
    n_b = Bp // TB

    # ---- wrapper-side prep (cheap; fused by XLA with the norm reductions) ---
    x_f32 = x.astype(jnp.float32)
    w_f32 = weight.astype(jnp.float32)

    # s / ||x|| and 1 / ||w|| (norms in f32, matching F.normalize semantics).
    inv_xn_s = s / jnp.maximum(
        jnp.sqrt(jnp.sum(x_f32 * x_f32, axis=-1, keepdims=True)), eps)   # (B, 1)
    inv_wn = (1.0 / jnp.maximum(
        jnp.sqrt(jnp.sum(w_f32 * w_f32, axis=-1, keepdims=True)), eps)).T  # (1, C)

    x_bf = x.astype(jnp.bfloat16)
    w_bf = weight.astype(jnp.bfloat16)          # no transpose, no (D, C) copy
    labels_col = labels.astype(jnp.int32).reshape(B, 1)

    if Bp != B:
        x_bf = jnp.pad(x_bf, ((0, Bp - B), (0, 0)))
        inv_xn_s = jnp.pad(inv_xn_s, ((0, Bp - B), (0, 0)))
        labels_col = jnp.pad(labels_col, ((0, Bp - B), (0, 0)),
                             constant_values=-1)  # never matches a class id
    if Cp != C:
        w_bf = jnp.pad(w_bf, ((0, Cp - C), (0, 0)))
        inv_wn = jnp.pad(inv_wn, ((0, 0), (0, Cp - C)))

    # ---- pallas_call --------------------------------------------------------
    kernel = _make_arcmargin_kernel(s, float(m), bool(easy_margin), TC)

    w_index = lambda ci, bi: (ci, 0)
    if single_buf_w:
        try:
            w_spec = pl.BlockSpec((TC, D), w_index, pipeline_mode=pl.Buffered(1))
        except Exception:
            w_spec = pl.BlockSpec((TC, D), w_index)
    else:
        w_spec = pl.BlockSpec((TC, D), w_index)

    cost = pl.CostEstimate(
        flops=2 * Bp * D * Cp,
        transcendentals=Bp * n_c,  # one sqrt per row per class tile
        bytes_accessed=(Cp * D * 2          # weight read once
                        + n_c * Bp * D * 2  # x re-streamed per class tile
                        + Bp * Cp * 4       # f32 logits out
                        + 4 * (2 * Bp + Cp)),
    )

    out_p = pl.pallas_call(
        kernel,
        out_shape=jax.ShapeDtypeStruct((Bp, Cp), jnp.float32),
        grid_spec=pltpu.PrefetchScalarGridSpec(
            num_scalar_prefetch=0,
            # Class axis OUTER: each weight tile is DMA'd from HBM exactly once
            # and stays resident while the smaller x tiles restream inside.
            grid=(n_c, n_b),
            in_specs=[
                pl.BlockSpec((TB, D), lambda ci, bi: (bi, 0)),   # x (bf16)
                w_spec,                                           # weight (bf16)
                pl.BlockSpec((TB, 1), lambda ci, bi: (bi, 0)),    # s / ||x||
                pl.BlockSpec((1, TC), lambda ci, bi: (0, ci)),    # 1 / ||w||
                pl.BlockSpec((TB, 1), lambda ci, bi: (bi, 0)),    # labels
            ],
            out_specs=pl.BlockSpec((TB, TC), lambda ci, bi: (bi, ci)),
        ),
        compiler_params=pltpu.CompilerParams(
            # Only the outer class axis is shardable: on v7x's 2 TensorCores each
            # core then reads a disjoint half of the weight (no duplicated HBM
            # traffic). No-op on single-TC v5e/v6e.
            dimension_semantics=("parallel", "arbitrary"),
            vmem_limit_bytes=int(vmem_budget),
        ),
        cost_estimate=cost,
    )(x_bf, w_bf, inv_xn_s, inv_wn, labels_col)

    if Bp == B and Cp == C:
        return out_p
    return out_p[:B, :C]


def _xavier_uniform(key, out_features, in_features):
    # torch.nn.init.xavier_uniform_: U(-a, a), a = sqrt(6 / (fan_in + fan_out))
    a = math.sqrt(6.0 / (in_features + out_features))
    return jax.random.uniform(
        key, (out_features, in_features), dtype=jnp.float32, minval=-a, maxval=a
    )


if __name__ == "__main__":
    in_features = 32
    out_features = 16
    batch = 8

    key = jax.random.PRNGKey(0)
    kx, kw, kl = jax.random.split(key, 3)

    x = jax.random.normal(kx, (batch, in_features), dtype=jnp.float32)
    weight = _xavier_uniform(kw, out_features, in_features)
    labels = jax.random.randint(kl, (batch,), 0, out_features, dtype=jnp.int32)

    out = arc_margin_product(x, weight, labels, s=30.0, m=0.5, easy_margin=False)
    out = jax.block_until_ready(out)

    # ---- references ---------------------------------------------------------
    def _margin(cosine, labels, num_classes, s=30.0, m=0.5):
        sine = jnp.sqrt(jnp.clip(1.0 - cosine ** 2, 0.0, 1.0))
        phi = cosine * math.cos(m) - sine * math.sin(m)
        phi = jnp.where(cosine > math.cos(math.pi - m), phi,
                        cosine - math.sin(math.pi - m) * m)
        one_hot = jax.nn.one_hot(labels, num_classes, dtype=jnp.float32)
        return (one_hot * phi + (1.0 - one_hot) * cosine) * s

    def ref_f32(x, w, labels, s=30.0, m=0.5):
        xn = x / jnp.maximum(jnp.linalg.norm(x, axis=-1, keepdims=True), 1e-12)
        wn = w / jnp.maximum(jnp.linalg.norm(w, axis=-1, keepdims=True), 1e-12)
        return _margin(xn @ wn.T, labels, w.shape[0], s, m)

    def ref_bf16_matmul(x, w, labels, s=30.0, m=0.5):
        inv_xn = 1.0 / jnp.maximum(jnp.linalg.norm(x, axis=-1, keepdims=True), 1e-12)
        inv_wn = 1.0 / jnp.maximum(jnp.linalg.norm(w, axis=-1, keepdims=True), 1e-12)
        dot = jnp.dot(x.astype(jnp.bfloat16), w.astype(jnp.bfloat16).T,
                      preferred_element_type=jnp.float32)
        return _margin(dot * inv_xn * inv_wn.T, labels, w.shape[0], s, m)

    exp_tight = ref_bf16_matmul(x, weight, labels)
    exp_f32 = ref_f32(x, weight, labels)

    assert out.shape == exp_f32.shape, "shape mismatch vs reference"
    # Tight check vs a reference that mirrors the bf16 matmul (f32 accumulate).
    assert jnp.allclose(out, exp_tight, atol=2e-3, rtol=2e-3), (
        "mismatch vs bf16-matmul reference")
    # Loose check vs the exact f32 PyTorch-equivalent reference (bf16 rounding).
    assert jnp.allclose(out, exp_f32, atol=2e-1, rtol=2e-2), (
        "mismatch vs f32 reference")

    print("KERNEL_OK")
</pallas_src>

<mosaic_0001>
module attributes {stable_mosaic.version = 11 : i64} {
  func.func @kernel(%arg0: i32, %arg1: i32, %arg2: memref<16x32xbf16, #tpu.memory_space<vmem>>, %arg3: memref<128x32xbf16, #tpu.memory_space<vmem>>, %arg4: memref<16x1xf32, #tpu.memory_space<vmem>>, %arg5: memref<1x128xf32, #tpu.memory_space<vmem>>, %arg6: memref<16x1xi32, #tpu.memory_space<vmem>>, %arg7: memref<16x128xf32, #tpu.memory_space<vmem>>) attributes {dimension_semantics = [#tpu.dimension_semantics<parallel>, #tpu.dimension_semantics<arbitrary>], iteration_bounds = array<i64: 1, 1>, scalar_prefetch = 0 : i64, scratch_operands = 0 : i64, tpu.core_type = #tpu.core_type<tc>, window_params = [{transform_indices = @transform_0, window_bounds = array<i64: 16, 32>}, {transform_indices = @transform_1, window_bounds = array<i64: 128, 32>}, {transform_indices = @transform_2, window_bounds = array<i64: 16, 1>}, {transform_indices = @transform_3, window_bounds = array<i64: 1, 128>}, {transform_indices = @transform_4, window_bounds = array<i64: 16, 1>}, {transform_indices = @transform_5, window_bounds = array<i64: 16, 128>}]} {
    %c0 = arith.constant 0 : index
    %c0_0 = arith.constant 0 : index
    %0 = vector.load %arg2[%c0, %c0_0] : memref<16x32xbf16, #tpu.memory_space<vmem>>, vector<16x32xbf16>
    %c0_1 = arith.constant 0 : index
    %c0_2 = arith.constant 0 : index
    %1 = vector.load %arg3[%c0_1, %c0_2] : memref<128x32xbf16, #tpu.memory_space<vmem>>, vector<128x32xbf16>
    %cst = arith.constant dense<0.000000e+00> : vector<16x128xf32>
    %2 = tpu.matmul %0, %1, %cst {dimension_numbers = #tpu.dot_dimension_numbers<[1], [1], [0], [0], [0, 0, 1, 0], [], []>} : vector<16x32xbf16>, vector<128x32xbf16>, vector<16x128xf32> -> vector<16x128xf32>
    %c0_3 = arith.constant 0 : index
    %c0_4 = arith.constant 0 : index
    %3 = vector.load %arg4[%c0_3, %c0_4] : memref<16x1xf32, #tpu.memory_space<vmem>>, vector<16x1xf32>
    %4 = vector.broadcast %3 : vector<16x1xf32> to vector<16x128xf32>
    %5 = arith.mulf %2, %4 : vector<16x128xf32>
    %c0_5 = arith.constant 0 : index
    %c0_6 = arith.constant 0 : index
    %6 = vector.load %arg5[%c0_5, %c0_6] : memref<1x128xf32, #tpu.memory_space<vmem>>, vector<1x128xf32>
    %7 = vector.broadcast %6 : vector<1x128xf32> to vector<16x128xf32>
    %8 = arith.mulf %5, %7 : vector<16x128xf32>
    %9 = tpu.iota {dimensions = array<i32: 1>} : vector<16x128xi32>
    %c128_i32 = arith.constant 128 : i32
    %10 = arith.muli %arg0, %c128_i32 : i32
    %11 = vector.broadcast %10 : i32 to vector<16x128xi32>
    %12 = arith.addi %9, %11 : vector<16x128xi32>
    %c0_7 = arith.constant 0 : index
    %c0_8 = arith.constant 0 : index
    %13 = vector.load %arg6[%c0_7, %c0_8] : memref<16x1xi32, #tpu.memory_space<vmem>>, vector<16x1xi32>
    %14 = vector.broadcast %13 : vector<16x1xi32> to vector<16x128xi32>
    %15 = arith.cmpi eq, %12, %14 : vector<16x128xi32>
    %cst_9 = arith.constant 0.000000e+00 : f32
    %16 = vector.broadcast %cst_9 : f32 to vector<16x128xf32>
    %17 = arith.select %15, %8, %16 : vector<16x128xi1>, vector<16x128xf32>
    %cst_10 = arith.constant dense<0.000000e+00> : vector<16xf32>
    %18 = vector.multi_reduction <add>, %17, %cst_10 [1] : vector<16x128xf32> to vector<16xf32>
    %19 = vector.shape_cast %18 : vector<16xf32> to vector<16x1xf32>
    %cst_11 = arith.constant 0.0333333351 : f32
    %20 = vector.broadcast %cst_11 : f32 to vector<16x1xf32>
    %21 = arith.mulf %20, %19 : vector<16x1xf32>
    %22 = arith.mulf %21, %21 : vector<16x1xf32>
    %cst_12 = arith.constant 1.000000e+00 : f32
    %23 = vector.broadcast %cst_12 : f32 to vector<16x1xf32>
    %24 = arith.subf %23, %22 : vector<16x1xf32>
    %cst_13 = arith.constant 0.000000e+00 : f32
    %25 = vector.broadcast %cst_13 : f32 to vector<16x1xf32>
    %26 = arith.maximumf %24, %25 : vector<16x1xf32>
    %27 = math.sqrt %26 : vector<16x1xf32>
    %cst_14 = arith.constant 0.87758255 : f32
    %28 = vector.broadcast %cst_14 : f32 to vector<16x1xf32>
    %29 = arith.mulf %21, %28 : vector<16x1xf32>
    %cst_15 = arith.constant 0.47942555 : f32
    %30 = vector.broadcast %cst_15 : f32 to vector<16x1xf32>
    %31 = arith.mulf %27, %30 : vector<16x1xf32>
    %32 = arith.subf %29, %31 : vector<16x1xf32>
    %cst_16 = arith.constant -0.87758255 : f32
    %33 = vector.broadcast %cst_16 : f32 to vector<16x1xf32>
    %34 = arith.cmpf ogt, %21, %33 : vector<16x1xf32>
    %cst_17 = arith.constant 0.239712775 : f32
    %35 = vector.broadcast %cst_17 : f32 to vector<16x1xf32>
    %36 = arith.subf %21, %35 : vector<16x1xf32>
    %37 = arith.select %34, %32, %36 : vector<16x1xi1>, vector<16x1xf32>
    %cst_18 = arith.constant 3.000000e+01 : f32
    %38 = vector.broadcast %cst_18 : f32 to vector<16x1xf32>
    %39 = arith.mulf %37, %38 : vector<16x1xf32>
    %40 = vector.shape_cast %39 : vector<16x1xf32> to vector<16x1xf32>
    %41 = vector.broadcast %40 : vector<16x1xf32> to vector<16x128xf32>
    %42 = arith.select %15, %41, %8 : vector<16x128xi1>, vector<16x128xf32>
    %c0_19 = arith.constant 0 : index
    %c0_20 = arith.constant 0 : index
    %43 = vector.load %arg7[%c0_19, %c0_20] : memref<16x128xf32, #tpu.memory_space<vmem>>, vector<16x128xf32>
    tpu.vector_store %arg7[%c0_19, %c0_20], %42 {strides = array<i32>} : memref<16x128xf32, #tpu.memory_space<vmem>>, vector<16x128xf32>,
    return
  }
  func.func @transform_0(%arg0: i32, %arg1: i32) -> (i32, i32) {
    %c0_i32 = arith.constant 0 : i32
    %c0_i32_0 = arith.constant 0 : i32
    return %arg1, %c0_i32 : i32, i32
  }
  func.func @transform_1(%arg0: i32, %arg1: i32) -> (i32, i32) {
    %c0_i32 = arith.constant 0 : i32
    %c0_i32_0 = arith.constant 0 : i32
    return %arg0, %c0_i32 : i32, i32
  }
  func.func @transform_2(%arg0: i32, %arg1: i32) -> (i32, i32) {
    %c0_i32 = arith.constant 0 : i32
    %c0_i32_0 = arith.constant 0 : i32
    return %arg1, %c0_i32 : i32, i32
  }
  func.func @transform_3(%arg0: i32, %arg1: i32) -> (i32, i32) {
    %c0_i32 = arith.constant 0 : i32
    %c0_i32_0 = arith.constant 0 : i32
    return %c0_i32, %arg0 : i32, i32
  }
  func.func @transform_4(%arg0: i32, %arg1: i32) -> (i32, i32) {
    %c0_i32 = arith.constant 0 : i32
    %c0_i32_0 = arith.constant 0 : i32
    return %arg1, %c0_i32 : i32, i32
  }
  func.func @transform_5(%arg0: i32, %arg1: i32) -> (i32, i32) {
    %c0_i32 = arith.constant 0 : i32
    return %arg1, %arg0 : i32, i32
  }
}

</mosaic_0001>

<llo_original>
// kernel: tpu_custom_call.1
$region0: #{tpu_custom_call.1}
  #allocation0 [shape = 'u32[]', space=smem, size = 0x4, offset = 0x4, fixed_abs, tag = 'smem constant byte address 0x4 - core index']
  #allocation1 [shape = 'u32[144,128]{1,0:T(1,128)}', space=vmem, size = 0x12000, scoped, tag = 'internal scratch']
  %s0 = inlined_call_operand.vmem [shape: bf16[16,32], index: 0, kind: input, shape index: {}]
  %s1 = inlined_call_operand.vmem [shape: bf16[128,32], index: 1, kind: input, shape index: {}]
  %s2 = inlined_call_operand.vmem [shape: f32[16,1], index: 2, kind: input, shape index: {}]
  %s3 = inlined_call_operand.vmem [shape: f32[1,128], index: 3, kind: input, shape index: {}]
  %s4 = inlined_call_operand.vmem [shape: s32[16,1], index: 4, kind: input, shape index: {}]
  %s5 = inlined_call_operand.hbm [shape: f32[16,128], index: 5, kind: output, shape index: {}]
  %s6 = sld [smem:[#allocation0]]
  $region30: #{tpu_custom_call.1} parent=0
    _
  %s8 = ssub.s32 1, %s6
  %s9 = scalar_select 0, %s8, %s6
  $region1: #{tpu_custom_call.1} parent=0
    #allocation2 [shape = 'u8[8192]{0}', space=vmem, size = 0x2000, scoped, tag = 'output window, operand 0, single buffered']
    #allocation3 [shape = 's32[1]{0}', space=sflag, size = 0x4, scoped, tag = 'scoped memory for tpu_custom_call.1']
    %10 = vsyncpa [#allocation3], 0
    // Predicated region
    $region2: #{tpu_custom_call.1} parent=1 // pred_check
      _
    $region3: #{tpu_custom_call.1} parent=1 // pred_check_branch
      %12 = sbr.rel (0) target = $region5
    $region4: #{tpu_custom_call.1} parent=1 // pred_region
      _
    $region5: #{tpu_custom_call.1} parent=1 // pred_fallthru
      _
    // Predicated region
    $region6: #{tpu_custom_call.1} parent=1 // pred_check
      _
    $region7: #{tpu_custom_call.1} parent=1 // pred_check_branch
      %14 = sbr.rel (0) target = $region9
    $region8: #{tpu_custom_call.1} parent=1 // pred_region
      _
    $region9: #{tpu_custom_call.1} parent=1 // pred_fallthru
      _
    // Predicated region
    $region10: #{tpu_custom_call.1} parent=1 // pred_check
      _
    $region11: #{tpu_custom_call.1} parent=1 // pred_check_branch
      %16 = sbr.rel (0) target = $region13
    $region12: #{tpu_custom_call.1} parent=1 // pred_region
      _
    $region13: #{tpu_custom_call.1} parent=1 // pred_fallthru
      _
    // Predicated region
    $region14: #{tpu_custom_call.1} parent=1 // pred_check
      _
    $region15: #{tpu_custom_call.1} parent=1 // pred_check_branch
      %18 = sbr.rel (0) target = $region17
    $region16: #{tpu_custom_call.1} parent=1 // pred_region
      _
    $region17: #{tpu_custom_call.1} parent=1 // pred_fallthru
      _
    // Predicated region
    $region18: #{tpu_custom_call.1} parent=1 // pred_check
      _
    $region19: #{tpu_custom_call.1} parent=1 // pred_check_branch
      %20 = sbr.rel (0) target = $region21
    $region20: #{tpu_custom_call.1} parent=1 // pred_region
      _
    $region21: #{tpu_custom_call.1} parent=1 // pred_fallthru
      _
    %v22 = vld [vmem:[%s0] sm:$0xf]
    %v23 = vld [vmem:[%s0 + $0x4] sm:$0xf]
    %v24 = vld [vmem:[%s1] sm:$0xf]
    %v25 = vld [vmem:[%s1 + $0x4] sm:$0xf]
    %v26 = vld [vmem:[%s1 + $0x8] sm:$0xf]
    %v27 = vld [vmem:[%s1 + $0xc] sm:$0xf]
    %v28 = vld [vmem:[%s1 + $0x10] sm:$0xf]
    %v29 = vld [vmem:[%s1 + $0x14] sm:$0xf]
    %v30 = vld [vmem:[%s1 + $0x18] sm:$0xf]
    %v31 = vld [vmem:[%s1 + $0x1c] sm:$0xf]
    %v32 = vld [vmem:[%s1 + $0x20] sm:$0xf]
    %v33 = vld [vmem:[%s1 + $0x24] sm:$0xf]
    %v34 = vld [vmem:[%s1 + $0x28] sm:$0xf]
    %v35 = vld [vmem:[%s1 + $0x2c] sm:$0xf]
    %v36 = vld [vmem:[%s1 + $0x30] sm:$0xf]
    %v37 = vld [vmem:[%s1 + $0x34] sm:$0xf]
    %v38 = vld [vmem:[%s1 + $0x38] sm:$0xf]
    %v39 = vld [vmem:[%s1 + $0x3c] sm:$0xf]
    %v42 = vunpack.c.l.b16 %v22
    %v43 = vunpack.c.l.b16 %v23
    %v44 = vpack.c.b16 %v43, %v42
    %v61 = vunpack.c.l.b16 %v24
    %v62 = vunpack.c.l.b16 %v25
    %v63 = vunpack.c.l.b16 %v26
    %v64 = vunpack.c.l.b16 %v27
    %v65 = vunpack.c.l.b16 %v28
    %v66 = vunpack.c.l.b16 %v29
    %v67 = vunpack.c.l.b16 %v30
    %v68 = vunpack.c.l.b16 %v31
    %v69 = vunpack.c.l.b16 %v32
    %v70 = vunpack.c.l.b16 %v33
    %v71 = vunpack.c.l.b16 %v34
    %v72 = vunpack.c.l.b16 %v35
    %v73 = vunpack.c.l.b16 %v36
    %v74 = vunpack.c.l.b16 %v37
    %v75 = vunpack.c.l.b16 %v38
    %v76 = vunpack.c.l.b16 %v39
    %v77 = vpack.c.b16 %v62, %v61
    %v78 = vpack.c.b16 %v64, %v63
    %v79 = vpack.c.b16 %v66, %v65
    %v80 = vpack.c.b16 %v68, %v67
    %v81 = vpack.c.b16 %v70, %v69
    %v82 = vpack.c.b16 %v72, %v71
    %v83 = vpack.c.b16 %v74, %v73
    %v84 = vpack.c.b16 %v76, %v75
    %vm85 = vcmask 261120
    %v87 = vsel %vm85, %v44, 0
    %v90 = vsel %vm85, %v77, 0
    %v93 = vsel %vm85, %v78, 0
    %v96 = vsel %vm85, %v79, 0
    %v99 = vsel %vm85, %v80, 0
    %v102 = vsel %vm85, %v81, 0
    %v105 = vsel %vm85, %v82, 0
    %v108 = vsel %vm85, %v83, 0
    %v111 = vsel %vm85, %v84, 0
    %113 = vmatprep.subr.bf16.mxu0 0
    %114 = vmatpush1.bf16.xpose.msra.mxu0 %v90
    %115 = vmatprep.subr.bf16.mxu0 0
    %116 = vmatpush1.bf16.xpose.msra.mxu0 %v93
    %117 = vmatprep.subr.bf16.mxu0 0
    %118 = vmatpush1.bf16.xpose.msra.mxu0 %v96
    %119 = vmatprep.subr.bf16.mxu0 0
    %120 = vmatpush1.bf16.xpose.msra.mxu0 %v99
    %121 = vmatprep.subr.bf16.mxu0 0
    %122 = vmatpush1.bf16.xpose.msra.mxu0 %v102
    %123 = vmatprep.subr.bf16.mxu0 0
    %124 = vmatpush1.bf16.xpose.msra.mxu0 %v105
    %125 = vmatprep.subr.bf16.mxu0 0
    %126 = vmatpush1.bf16.xpose.msra.mxu0 %v108
    %127 = vmatprep.subr.bf16.mxu0 0
    %128 = vmatpush1.bf16.xpose.msra.mxu0 %v111
    %129 = vmatprep.subr.bf16.mxu0 0
    %130 = vmatpush1.bf16.xpose.msra.mxu0 0
    %131 = vmatprep.subr.bf16.mxu0 0
    %132 = vmatpush1.bf16.xpose.msra.mxu0 0
    %133 = vmatprep.subr.bf16.mxu0 0
    %134 = vmatpush1.bf16.xpose.msra.mxu0 0
    %135 = vmatprep.subr.bf16.mxu0 0
    %136 = vmatpush1.bf16.xpose.msra.mxu0 0
    %137 = vmatprep.subr.bf16.mxu0 0
    %138 = vmatpush1.bf16.xpose.msra.mxu0 0
    %139 = vmatprep.subr.bf16.mxu0 0
    %140 = vmatpush1.bf16.xpose.msra.mxu0 0
    %141 = vmatprep.subr.bf16.mxu0 0
    %142 = vmatpush1.bf16.xpose.msra.mxu0 0
    %143 = vmatprep.subr.bf16.mxu0 0
    %144 = vmatpush1.bf16.xpose.msra.mxu0 0
    %145 = vmatprep.mubr.bf16.mxu0 0
    %146 = vmatmul.mubr.bf16.gmra.mrb[0].mxu0 %v87
    %v147 = vpop.f32.mrb[0].mxu0
    %v148 = vadd.f32 0.0, %v147
    %v149 = vpop.f32.mrb[0].mxu0
    %v150 = vpop.f32.mrb[0].mxu0
    %v151 = vadd.f32 0.0, %v150
    %v152 = vpop.f32.mrb[0].mxu0
    %153 = vdwg.mxu0
    %v154 = vld [vmem:[%s2] sm:$0xff]
    %v155 = vld [vmem:[%s2 + $0x8] sm:$0xff]
    %157 = vset.pattern.permute.xlu0 0
    %158 = vperm.xlu0 %157, %v154
    %v159 = vpop.permute.xlu0 %158
    %162 = vset.pattern.permute.xlu0 0
    %163 = vperm.xlu0 %162, %v155
    %v164 = vpop.permute.xlu0 %163
    %v166 = vmul.f32 %v148, %v159
    %v167 = vmul.f32 %v151, %v164
    %v168 = vld [vmem:[%s3] sm:$0x1]
    %v170 = vlaneseq
    %v171 = vshrl.u32 %v170, 7
    %v172 = vsub.s32 0, %v171
    %v173 = vrot.slane %v168, %v172
    %v175 = vmul.f32 %v166, %v173
    %v176 = vmul.f32 %v167, %v173
    %v177 = vlaneseq
    %v178 = vand.u32 %v177, 127
    %s179 = smul.u32 0, 128
    %v180 = vstv %s179
    %v181 = vadd.s32 %v178, %v180
    %v182 = vld [vmem:[%s4] sm:$0xff]
    %v183 = vld [vmem:[%s4 + $0x8] sm:$0xff]
    %184 = vset.pattern.permute.xlu0 0
    %185 = vperm.xlu0 %184, %v182
    %v186 = vpop.permute.xlu0 %185
    %187 = vset.pattern.permute.xlu0 0
    %188 = vperm.xlu0 %187, %v183
    %v189 = vpop.permute.xlu0 %188
    %vm190 = vcmp.eq.s32.totalorder %v181, %v186
    %vm191 = vcmp.eq.s32.totalorder %v181, %v189
    %v192 = vsel %vm190, %v175, 0.0
    %v193 = vsel %vm191, %v176, 0.0
    %194 = vadd.xlane.f32.xlu0 %v192
    %v195 = vpop.xlane.xlu0 %194
    %196 = vadd.xlane.f32.xlu0 %v193
    %v197 = vpop.xlane.xlu0 %196
    %v198 = vmul.f32 %v195, 0.033333335
    %v199 = vmul.f32 %v197, 0.033333335
    %v200 = vmul.f32 %v198, %v198
    %v201 = vmul.f32 %v199, %v199
    %v202 = vsub.f32 1.0, %v200
    %v203 = vsub.f32 1.0, %v201
    %v204 = vmax.f32 %v202, 0.0
    %v205 = vmax.f32 %v203, 0.0
    %v206 = vrsqrt.pop %v204
    %v207 = vmul.f32 %v204, %v206
    %vm208 = vcmp.eq.f32.partialorder %v204, inf
    %v209 = vsel %vm208, %v204, %v207
    %vm210 = vcmp.eq.f32.partialorder %v204, 0.0
    %v211 = vand.u32 %v204, 2147483648
    %v212 = vsel %vm210, %v211, %v209
    %v213 = vrsqrt.pop %v205
    %v214 = vmul.f32 %v205, %v213
    %vm215 = vcmp.eq.f32.partialorder %v205, inf
    %v216 = vsel %vm215, %v205, %v214
    %vm217 = vcmp.eq.f32.partialorder %v205, 0.0
    %v218 = vand.u32 %v205, 2147483648
    %v219 = vsel %vm217, %v218, %v216
    %v220 = vmul.f32 %v198, 0.87758255
    %v221 = vmul.f32 %v199, 0.87758255
    %v222 = vmul.f32 %v212, 0.47942555
    %v223 = vmul.f32 %v219, 0.47942555
    %v224 = vsub.f32 %v220, %v222
    %v225 = vsub.f32 %v221, %v223
    %vm226 = vcmp.gt.f32.partialorder %v198, -0.87758255
    %vm227 = vcmp.gt.f32.partialorder %v199, -0.87758255
    %v228 = vsub.f32 %v198, 0.23971277
    %v229 = vsub.f32 %v199, 0.23971277
    %v230 = vsel %vm226, %v224, %v228
    %v231 = vsel %vm227, %v225, %v229
    %v232 = vmul.f32 %v230, 30.0
    %v233 = vmul.f32 %v231, 30.0
    %v234 = vsel %vm190, %v232, %v175
    %v235 = vsel %vm191, %v233, %v176
    %236 = vst [vmem:[#allocation2] sm:$0xff] %v234
    %237 = vst [vmem:[#allocation2 + $0x8] sm:$0xff] %v235
    // Predicated region
    $region22: #{tpu_custom_call.1} parent=1 // pred_check
      _
    $region23: #{tpu_custom_call.1} parent=1 // pred_check_branch
      %239 = sbr.rel (0) target = $region25
    $region24: #{tpu_custom_call.1} parent=1 // pred_region
      %s241 = ssub.s32 256, 256
      %242 = vsyncadd [#allocation3], %s241
      %s243 = sshll.u32 [#allocation2], 4
      %s244 = int_to_ptr.vmem [resolvable:$true] %s243
      %249 = dma.vmem_to_hbm [thread:$0]  %s244, 256, %s5, [#allocation3], 128, 128, 8
    $region25: #{tpu_custom_call.1} parent=1 // pred_fallthru
      _
    // Predicated region
    $region26: #{tpu_custom_call.1} parent=1 // pred_check
      _
    $region27: #{tpu_custom_call.1} parent=1 // pred_check_branch
      %251 = sbr.rel (0) target = $region29
    $region28: #{tpu_custom_call.1} parent=1 // pred_region
      %252 = dma.done [#allocation3], 256
    $region29: #{tpu_custom_call.1} parent=1 // pred_fallthru
      _
    %253 = vsyncpa [#allocation3], 1

</llo_original>
